<compile_context>
chip_gen: v7x
topology: tpu7x:2x2x1
jax: 0.10.0
libtpu: 0.0.40
codegen_flags: <defaults>
</compile_context>

<pallas_src>
import functools

import jax
import jax.numpy as jnp
from jax.experimental import pallas as pl
from jax.experimental.pallas import tpu as pltpu


def _relu(x):
    return jnp.maximum(x, 0.0)


def _sigmoid(x):
    # numerically-stable sigmoid via tanh (EUP op): sigmoid(x) = 0.5*(1+tanh(x/2))
    return 0.5 * (jnp.tanh(0.5 * x) + 1.0)


def _round_up(n, m):
    return ((n + m - 1) // m) * m


def _tile_seed(w, reps_total):
    """0/1 matrix (w, w*k) producing k lane-copies of a width-w vector.

    k is the largest divisor of reps_total with w*k <= 128, so the remaining
    reps_total/k copies can be made in-kernel by lane-ALIGNED vreg duplication
    (pure VPU/copy work, no MXU pushes)."""
    k = 1
    limit = max(1, 128 // w)
    for c in range(1, limit + 1):
        if reps_total % c == 0 and w * c <= 128:
            k = c
    return jnp.tile(jnp.eye(w, dtype=jnp.float32), (1, k))   # (w, w*k)


def _dup_lanes(x, reps):
    """Concat `reps` identical copies of x (N, w) along lanes via log2 doubling.

    With w a multiple of 128 every concat piece is vreg-aligned; this is pure data
    replication on VPU/store slots (the MXU is the bottleneck, so it is ~free)."""
    pieces = []
    cur = x
    r = int(reps)
    while r > 0:
        if r & 1:
            pieces.append(cur)
        r >>= 1
        if r:
            cur = jnp.concatenate([cur, cur], axis=-1)
    return pieces[0] if len(pieces) == 1 else jnp.concatenate(pieces, axis=-1)


def bilinear_fusion_kernel(
    x12_ref,   # (TILE_N, dim1+dim2)        activations [vec1 | vec2] (f32)
    wh12_ref,  # (dim1+dim2, d1+d2)         block-diag gate-h weights
    rx_ref,    # (dim1, dim1*dim2)          repeat() half of x-expansion (0/1)
    tx_ref,    # (dim2, <=128)              tile() seed for x2 (0/1)
    wz12_ref,  # (dim1*dim2, d1+d2)         flattened bilinear weights [Wz1 | Wz2]
    wo12_ref,  # (d1+d2, d1+d2)             block-diag gate-o weights
    bhzo_ref,  # (3, d1+d2)                 packed biases (rows: h, z, o) (f32)
    ro_ref,    # (d1, d1*d2)                repeat() half of o-expansion (0/1)
    to_ref,    # (d2, <=128)                tile() seed for o2 (0/1)
    weA_ref,   # (d1*d2, 256)               encoder1 weight on o1(x)o2
    weBC_ref,  # (d1+d2, 256)               encoder1 weight on [o1 | o2]
    be1_ref,   # (1, 256)                   encoder1 bias + constant W_D term (f32)
    we2a_ref,  # (256, mmhid_pad)           encoder2 weight on e1
    we2b_ref,  # (dim1+dim2, mmhid_pad)     encoder2 weight on skip [vec1 | vec2]
    be2_ref,   # (1, mmhid_pad)             encoder2 bias (f32)
    out_ref,   # (TILE_N, mmhid_pad)
):
    dim1 = rx_ref.shape[0]
    d1 = ro_ref.shape[0]

    x12 = x12_ref[...]                     # f32
    x1 = x12[:, :dim1]
    x2 = x12[:, dim1:]

    def mm(a, w_ref):
        w = w_ref[...]
        # cast activations to the weight dtype (bf16 MXU inputs by default),
        # always accumulate in f32.
        return jnp.dot(a.astype(w.dtype), w, preferred_element_type=jnp.float32)

    # --- gates: h1|h2 from one matmul over block-diagonal weights ---
    h12 = _relu(mm(x12, wh12_ref) + bhzo_ref[0:1, :])

    # --- x1 (x) x2 outer product: repeat(x1) on the MXU, tile(x2) mostly off the MXU ---
    rep_x1 = mm(x1, rx_ref)                                            # [n, i*dim2+j] = x1[n, i]
    til_x2 = _dup_lanes(mm(x2, tx_ref), rx_ref.shape[1] // tx_ref.shape[1])  # = x2[n, j]
    op_x = rep_x1 * til_x2                                             # (TILE_N, dim1*dim2)

    # --- z1|z2 from a single (N, dim1*dim2) x (dim1*dim2, d1+d2) matmul ---
    z12 = mm(op_x, wz12_ref) + bhzo_ref[1:2, :]
    g12 = _sigmoid(z12) * h12
    o12 = _relu(mm(g12, wo12_ref) + bhzo_ref[2:3, :])                  # [o1 | o2]
    o1 = o12[:, :d1]
    o2 = o12[:, d1:]

    # --- o1 (x) o2 outer product (same repeat-on-MXU / tile-off-MXU split) ---
    rep_o1 = mm(o1, ro_ref)
    til_o2 = _dup_lanes(mm(o2, to_ref), ro_ref.shape[1] // to_ref.shape[1])
    op_o = rep_o1 * til_o2                                             # (TILE_N, d1*d2)

    # --- encoder1 (no in-kernel concat): A.(o1(x)o2) + [B|C].[o1|o2] + (D + b_e1) ---
    e1 = _relu(mm(op_o, weA_ref) + mm(o12, weBC_ref) + be1_ref[...])

    # --- encoder2 + skip (no in-kernel concat, lane-dense 128-padded output) ---
    out_ref[...] = _relu(mm(e1, we2a_ref) + mm(x12, we2b_ref) + be2_ref[...])


def _prepare_args(params, use_bf16):
    """Fold / fuse / transpose parameters (plain JAX, outside the kernel)."""
    f32 = jnp.float32
    wdt = jnp.bfloat16 if use_bf16 else jnp.float32

    wh1, wh2 = params["wh1"], params["wh2"]
    d1, dim1 = wh1.shape
    d2, dim2 = wh2.shape
    dim12, d12 = dim1 + dim2, d1 + d2
    henc = params["We1"].shape[0]                 # 256
    mmhid = params["be2"].shape[0]
    mmhid_pad = _round_up(mmhid, 128)

    # block-diagonal gate weights (h and o paths fused -> one matmul each)
    wh12 = jnp.zeros((dim12, d12), f32)
    wh12 = wh12.at[:dim1, :d1].set(wh1.T).at[dim1:, d1:].set(wh2.T)
    wo12 = jnp.zeros((d12, d12), f32)
    wo12 = wo12.at[:d1, :d1].set(params["wo1"].T).at[d1:, d1:].set(params["wo2"].T)

    # repeat() halves of the outer-product expansions (slim, no block-diag zero padding):
    #   (x1 @ rx)[n, i*dim2+j] = x1[n, i]
    rx = jnp.repeat(jnp.eye(dim1, dtype=f32), dim2, axis=1)       # (dim1, dim1*dim2)
    ro = jnp.repeat(jnp.eye(d1, dtype=f32), d2, axis=1)           # (d1, d1*d2)
    # tile() seed matrices (replicate x2/o2 up to <=128 lanes; rest is in-kernel vreg dup)
    tx = _tile_seed(dim2, dim1)
    to = _tile_seed(d2, d1)

    # flattened bilinear weights, z1|z2 fused: Wz_flat[i*dim2+j, k] = Wz[k, i, j]
    wz12 = jnp.concatenate(
        [params["Wz1"].reshape(d1, dim1 * dim2).T,
         params["Wz2"].reshape(d2, dim1 * dim2).T], axis=1)       # (dim1*dim2, d1+d2)

    # packed small biases (rows: h, z, o)
    bhzo = jnp.stack(
        [jnp.concatenate([params["bh1"], params["bh2"]]),
         jnp.concatenate([params["bz1"], params["bz2"]]),
         jnp.concatenate([params["bo1"], params["bo2"]])], axis=0)   # (3, d1+d2)

    # encoder1 decomposition:  We1 . vec([o1,1][o2,1]^T) = A.(o1(x)o2) + B.o1 + C.o2 + D
    We1r = params["We1"].reshape(henc, d1 + 1, d2 + 1)
    weA = We1r[:, :d1, :d2].reshape(henc, d1 * d2).T              # (d1*d2, 256)
    weBC = jnp.concatenate([We1r[:, :d1, d2].T, We1r[:, d1, :d2].T], axis=0)  # (d1+d2, 256)
    be1 = (We1r[:, d1, d2] + params["be1"])[None, :]              # W_D folded into the bias

    # encoder2 split (e1 part / skip part), output columns padded to 128 lanes
    we2a = params["We2"][:, :henc].T                              # (256, mmhid)
    we2b = params["We2"][:, henc:].T                              # (dim12, mmhid)
    padc = ((0, 0), (0, mmhid_pad - mmhid))
    we2a = jnp.pad(we2a, padc)
    we2b = jnp.pad(we2b, padc)
    be2 = jnp.pad(params["be2"], (0, mmhid_pad - mmhid))[None, :]

    return (wh12.astype(wdt), rx.astype(wdt), tx.astype(wdt), wz12.astype(wdt),
            wo12.astype(wdt), bhzo.astype(f32), ro.astype(wdt), to.astype(wdt),
            weA.astype(wdt), weBC.astype(wdt), be1.astype(f32),
            we2a.astype(wdt), we2b.astype(wdt), be2.astype(f32))


@functools.partial(jax.jit, static_argnames=("tile_n", "use_bf16"))
def bilinear_fusion_forward(params, vec1, vec2, *, tile_n=256, use_bf16=True):
    n = vec1.shape[0]
    weights = _prepare_args(params, use_bf16)
    x12 = jnp.concatenate([vec1, vec2], axis=1).astype(jnp.float32)
    dim12 = x12.shape[1]
    mmhid = params["be2"].shape[0]
    mmhid_pad = _round_up(mmhid, 128)

    # batch tiling: pad to a sublane-friendly tile; aim for >= 2 grid steps so the
    # "parallel" batch axis can be sharded across both TensorCores on v7x megacore parts.
    tile = max(8, min(tile_n, _round_up(pl.cdiv(n, 2), 8)))
    n_pad = _round_up(n, tile)
    if n_pad != n:
        x12 = jnp.pad(x12, ((0, n_pad - n), (0, 0)))
    grid = (n_pad // tile,)

    in_specs = [pl.BlockSpec((tile, dim12), lambda i: (i, 0))]
    # weights are grid-invariant (constant block index) -> the pipeline fetches them once.
    in_specs += [pl.BlockSpec(w.shape, lambda i: (0, 0)) for w in weights]

    out = pl.pallas_call(
        bilinear_fusion_kernel,
        out_shape=jax.ShapeDtypeStruct((n_pad, mmhid_pad), jnp.float32),
        grid=grid,
        in_specs=in_specs,
        out_specs=pl.BlockSpec((tile, mmhid_pad), lambda i: (i, 0)),
        compiler_params=pltpu.CompilerParams(
            dimension_semantics=("parallel",),
            vmem_limit_bytes=48 * 1024 * 1024,
        ),
    )(x12, *weights)
    return out[:n, :mmhid]


def init_params(key, dim1=32, dim2=32, mmhid=64):
    """Deterministic synthetic parameters in PyTorch (out_features, in_features) convention."""
    d1, d2 = dim1, dim2              # scale_dim1 = scale_dim2 = 1
    skip_dim = dim1 + dim2           # skip = 1
    names_shapes = [
        ("wh1", (d1, dim1)), ("bh1", (d1,)),
        ("Wz1", (d1, dim1, dim2)), ("bz1", (d1,)),
        ("wo1", (d1, d1)), ("bo1", (d1,)),
        ("wh2", (d2, dim2)), ("bh2", (d2,)),
        ("Wz2", (d2, dim1, dim2)), ("bz2", (d2,)),
        ("wo2", (d2, d2)), ("bo2", (d2,)),
        ("We1", (256, (d1 + 1) * (d2 + 1))), ("be1", (256,)),
        ("We2", (mmhid, 256 + skip_dim)), ("be2", (mmhid,)),
    ]
    keys = jax.random.split(key, len(names_shapes))
    return {n: 0.05 * jax.random.normal(k, s, jnp.float32)
            for (n, s), k in zip(names_shapes, keys)}


def reference_forward(params, v1, v2):
    """Pure-JAX reference mirroring the PyTorch forward (dropout = identity in eval)."""
    h1 = _relu(v1 @ params["wh1"].T + params["bh1"])
    z1 = jnp.einsum("ni,kij,nj->nk", v1, params["Wz1"], v2) + params["bz1"]
    o1 = _relu((jax.nn.sigmoid(z1) * h1) @ params["wo1"].T + params["bo1"])
    h2 = _relu(v2 @ params["wh2"].T + params["bh2"])
    z2 = jnp.einsum("ni,kij,nj->nk", v1, params["Wz2"], v2) + params["bz2"]
    o2 = _relu((jax.nn.sigmoid(z2) * h2) @ params["wo2"].T + params["bo2"])
    ones = jnp.ones((v1.shape[0], 1), jnp.float32)
    o1e = jnp.concatenate([o1, ones], axis=1)
    o2e = jnp.concatenate([o2, ones], axis=1)
    o12 = (o1e[:, :, None] * o2e[:, None, :]).reshape(v1.shape[0], -1)
    e1 = _relu(o12 @ params["We1"].T + params["be1"])
    cat = jnp.concatenate([e1, v1, v2], axis=1)
    return _relu(cat @ params["We2"].T + params["be2"])


if __name__ == "__main__":
    # TODO(synk): nn.Dropout layers are identity in eval mode; training-mode RNG masking
    # is not implemented in the kernel.
    key = jax.random.PRNGKey(0)
    kp, k1, k2, k3, k4 = jax.random.split(key, 5)
    batch, dim1, dim2, mmhid = 2, 32, 32, 64

    params = init_params(kp, dim1=dim1, dim2=dim2, mmhid=mmhid)
    vec1 = jax.random.normal(k1, (batch, dim1), jnp.float32)
    vec2 = jax.random.normal(k2, (batch, dim2), jnp.float32)
    ref = reference_forward(params, vec1, vec2)

    # exact f32 path (tight tolerance)
    out_f32 = jax.block_until_ready(
        bilinear_fusion_forward(params, vec1, vec2, use_bf16=False))
    assert out_f32.shape == (batch, mmhid)
    if not jnp.allclose(out_f32, ref, atol=1e-4, rtol=1e-4):
        raise ValueError("f32 Pallas output does not match JAX reference")

    # default bf16 MXU-input path (f32 accumulation / f32 elementwise)
    out_bf16 = jax.block_until_ready(bilinear_fusion_forward(params, vec1, vec2))
    if float(jnp.max(jnp.abs(out_bf16 - ref))) > 5e-2:
        raise ValueError("bf16 Pallas output deviates too far from JAX reference")

    # exercise the batch grid (non-divisible batch -> padded remainder tile, >=2 grid steps)
    big_n = 300
    v1b = jax.random.normal(k3, (big_n, dim1), jnp.float32)
    v2b = jax.random.normal(k4, (big_n, dim2), jnp.float32)
    out_b = jax.block_until_ready(
        bilinear_fusion_forward(params, v1b, v2b, tile_n=128, use_bf16=False))
    ref_b = reference_forward(params, v1b, v2b)
    if not jnp.allclose(out_b, ref_b, atol=1e-4, rtol=1e-4):
        raise ValueError("gridded f32 Pallas output does not match JAX reference")

    print("KERNEL_OK")
</pallas_src>

<mosaic_0001>
module attributes {stable_mosaic.version = 11 : i64} {
  func.func @bilinear_fusion_kernel(%arg0: i32, %arg1: memref<8x64xf32, #tpu.memory_space<vmem>>, %arg2: memref<64x64xf32, #tpu.memory_space<vmem>>, %arg3: memref<32x1024xf32, #tpu.memory_space<vmem>>, %arg4: memref<32x128xf32, #tpu.memory_space<vmem>>, %arg5: memref<1024x64xf32, #tpu.memory_space<vmem>>, %arg6: memref<64x64xf32, #tpu.memory_space<vmem>>, %arg7: memref<3x64xf32, #tpu.memory_space<vmem>>, %arg8: memref<32x1024xf32, #tpu.memory_space<vmem>>, %arg9: memref<32x128xf32, #tpu.memory_space<vmem>>, %arg10: memref<1024x256xf32, #tpu.memory_space<vmem>>, %arg11: memref<64x256xf32, #tpu.memory_space<vmem>>, %arg12: memref<1x256xf32, #tpu.memory_space<vmem>>, %arg13: memref<256x128xf32, #tpu.memory_space<vmem>>, %arg14: memref<64x128xf32, #tpu.memory_space<vmem>>, %arg15: memref<1x128xf32, #tpu.memory_space<vmem>>, %arg16: memref<8x128xf32, #tpu.memory_space<vmem>>) attributes {dimension_semantics = [#tpu.dimension_semantics<parallel>], iteration_bounds = array<i64: 1>, scalar_prefetch = 0 : i64, scratch_operands = 0 : i64, tpu.core_type = #tpu.core_type<tc>, window_params = [{transform_indices = @transform_0, window_bounds = array<i64: 8, 64>}, {pipeline_mode = #tpu.pipeline_mode<synchronous>, transform_indices = @transform_1, window_bounds = array<i64: 64, 64>}, {pipeline_mode = #tpu.pipeline_mode<synchronous>, transform_indices = @transform_2, window_bounds = array<i64: 32, 1024>}, {pipeline_mode = #tpu.pipeline_mode<synchronous>, transform_indices = @transform_3, window_bounds = array<i64: 32, 128>}, {pipeline_mode = #tpu.pipeline_mode<synchronous>, transform_indices = @transform_4, window_bounds = array<i64: 1024, 64>}, {pipeline_mode = #tpu.pipeline_mode<synchronous>, transform_indices = @transform_5, window_bounds = array<i64: 64, 64>}, {pipeline_mode = #tpu.pipeline_mode<synchronous>, transform_indices = @transform_6, window_bounds = array<i64: 3, 64>}, {pipeline_mode = #tpu.pipeline_mode<synchronous>, transform_indices = @transform_7, window_bounds = array<i64: 32, 1024>}, {pipeline_mode = #tpu.pipeline_mode<synchronous>, transform_indices = @transform_8, window_bounds = array<i64: 32, 128>}, {pipeline_mode = #tpu.pipeline_mode<synchronous>, transform_indices = @transform_9, window_bounds = array<i64: 1024, 256>}, {pipeline_mode = #tpu.pipeline_mode<synchronous>, transform_indices = @transform_10, window_bounds = array<i64: 64, 256>}, {pipeline_mode = #tpu.pipeline_mode<synchronous>, transform_indices = @transform_11, window_bounds = array<i64: 1, 256>}, {pipeline_mode = #tpu.pipeline_mode<synchronous>, transform_indices = @transform_12, window_bounds = array<i64: 256, 128>}, {pipeline_mode = #tpu.pipeline_mode<synchronous>, transform_indices = @transform_13, window_bounds = array<i64: 64, 128>}, {pipeline_mode = #tpu.pipeline_mode<synchronous>, transform_indices = @transform_14, window_bounds = array<i64: 1, 128>}, {transform_indices = @transform_15, window_bounds = array<i64: 8, 128>}]} {
    %c0 = arith.constant 0 : index
    %c0_0 = arith.constant 0 : index
    %0 = vector.load %arg1[%c0, %c0_0] : memref<8x64xf32, #tpu.memory_space<vmem>>, vector<8x64xf32>
    %1 = vector.extract_strided_slice %0 {offsets = [0, 0], sizes = [8, 32], strides = [1, 1]} : vector<8x64xf32> to vector<8x32xf32>
    %2 = vector.extract_strided_slice %0 {offsets = [0, 32], sizes = [8, 32], strides = [1, 1]} : vector<8x64xf32> to vector<8x32xf32>
    %c0_1 = arith.constant 0 : index
    %c0_2 = arith.constant 0 : index
    %3 = vector.load %arg2[%c0_1, %c0_2] : memref<64x64xf32, #tpu.memory_space<vmem>>, vector<64x64xf32>
    %cst = arith.constant dense<0.000000e+00> : vector<8x64xf32>
    %4 = tpu.matmul %0, %3, %cst {dimension_numbers = #tpu.dot_dimension_numbers<[1], [0], [0], [1], [0, 0, 1, 1], [], []>} : vector<8x64xf32>, vector<64x64xf32>, vector<8x64xf32> -> vector<8x64xf32>
    %c0_3 = arith.constant 0 : index
    %c0_4 = arith.constant 0 : index
    %5 = vector.load %arg7[%c0_3, %c0_4] : memref<3x64xf32, #tpu.memory_space<vmem>>, vector<1x64xf32>
    %6 = vector.broadcast %5 : vector<1x64xf32> to vector<8x64xf32>
    %7 = arith.addf %4, %6 : vector<8x64xf32>
    %cst_5 = arith.constant 0.000000e+00 : f32
    %8 = vector.broadcast %cst_5 : f32 to vector<8x64xf32>
    %9 = arith.maximumf %7, %8 : vector<8x64xf32>
    %c0_6 = arith.constant 0 : index
    %c0_7 = arith.constant 0 : index
    %10 = vector.load %arg3[%c0_6, %c0_7] : memref<32x1024xf32, #tpu.memory_space<vmem>>, vector<32x1024xf32>
    %cst_8 = arith.constant dense<0.000000e+00> : vector<8x1024xf32>
    %11 = tpu.matmul %1, %10, %cst_8 {dimension_numbers = #tpu.dot_dimension_numbers<[1], [0], [0], [1], [0, 0, 1, 1], [], []>} : vector<8x32xf32>, vector<32x1024xf32>, vector<8x1024xf32> -> vector<8x1024xf32>
    %c0_9 = arith.constant 0 : index
    %c0_10 = arith.constant 0 : index
    %12 = vector.load %arg4[%c0_9, %c0_10] : memref<32x128xf32, #tpu.memory_space<vmem>>, vector<32x128xf32>
    %cst_11 = arith.constant dense<0.000000e+00> : vector<8x128xf32>
    %13 = tpu.matmul %2, %12, %cst_11 {dimension_numbers = #tpu.dot_dimension_numbers<[1], [0], [0], [1], [0, 0, 1, 1], [], []>} : vector<8x32xf32>, vector<32x128xf32>, vector<8x128xf32> -> vector<8x128xf32>
    %14 = tpu.concatenate %13, %13 in 1 : vector<8x128xf32>, vector<8x128xf32> -> vector<8x256xf32>
    %15 = tpu.concatenate %14, %14 in 1 : vector<8x256xf32>, vector<8x256xf32> -> vector<8x512xf32>
    %16 = tpu.concatenate %15, %15 in 1 : vector<8x512xf32>, vector<8x512xf32> -> vector<8x1024xf32>
    %17 = arith.mulf %11, %16 : vector<8x1024xf32>
    %c0_12 = arith.constant 0 : index
    %c0_13 = arith.constant 0 : index
    %18 = vector.load %arg5[%c0_12, %c0_13] : memref<1024x64xf32, #tpu.memory_space<vmem>>, vector<1024x64xf32>
    %cst_14 = arith.constant dense<0.000000e+00> : vector<8x64xf32>
    %19 = tpu.matmul %17, %18, %cst_14 {dimension_numbers = #tpu.dot_dimension_numbers<[1], [0], [0], [1], [0, 0, 1, 1], [], []>} : vector<8x1024xf32>, vector<1024x64xf32>, vector<8x64xf32> -> vector<8x64xf32>
    %c1 = arith.constant 1 : index
    %c0_15 = arith.constant 0 : index
    %20 = vector.load %arg7[%c1, %c0_15] : memref<3x64xf32, #tpu.memory_space<vmem>>, vector<1x64xf32>
    %21 = vector.broadcast %20 : vector<1x64xf32> to vector<8x64xf32>
    %22 = arith.addf %19, %21 : vector<8x64xf32>
    %cst_16 = arith.constant 5.000000e-01 : f32
    %23 = vector.broadcast %cst_16 : f32 to vector<8x64xf32>
    %24 = arith.mulf %23, %22 : vector<8x64xf32>
    %25 = math.tanh %24 : vector<8x64xf32>
    %cst_17 = arith.constant 1.000000e+00 : f32
    %26 = vector.broadcast %cst_17 : f32 to vector<8x64xf32>
    %27 = arith.addf %25, %26 : vector<8x64xf32>
    %cst_18 = arith.constant 5.000000e-01 : f32
    %28 = vector.broadcast %cst_18 : f32 to vector<8x64xf32>
    %29 = arith.mulf %28, %27 : vector<8x64xf32>
    %30 = arith.mulf %29, %9 : vector<8x64xf32>
    %c0_19 = arith.constant 0 : index
    %c0_20 = arith.constant 0 : index
    %31 = vector.load %arg6[%c0_19, %c0_20] : memref<64x64xf32, #tpu.memory_space<vmem>>, vector<64x64xf32>
    %cst_21 = arith.constant dense<0.000000e+00> : vector<8x64xf32>
    %32 = tpu.matmul %30, %31, %cst_21 {dimension_numbers = #tpu.dot_dimension_numbers<[1], [0], [0], [1], [0, 0, 1, 1], [], []>} : vector<8x64xf32>, vector<64x64xf32>, vector<8x64xf32> -> vector<8x64xf32>
    %c2 = arith.constant 2 : index
    %c0_22 = arith.constant 0 : index
    %33 = vector.load %arg7[%c2, %c0_22] : memref<3x64xf32, #tpu.memory_space<vmem>>, vector<1x64xf32>
    %34 = vector.broadcast %33 : vector<1x64xf32> to vector<8x64xf32>
    %35 = arith.addf %32, %34 : vector<8x64xf32>
    %cst_23 = arith.constant 0.000000e+00 : f32
    %36 = vector.broadcast %cst_23 : f32 to vector<8x64xf32>
    %37 = arith.maximumf %35, %36 : vector<8x64xf32>
    %38 = vector.extract_strided_slice %37 {offsets = [0, 0], sizes = [8, 32], strides = [1, 1]} : vector<8x64xf32> to vector<8x32xf32>
    %39 = vector.extract_strided_slice %37 {offsets = [0, 32], sizes = [8, 32], strides = [1, 1]} : vector<8x64xf32> to vector<8x32xf32>
    %c0_24 = arith.constant 0 : index
    %c0_25 = arith.constant 0 : index
    %40 = vector.load %arg8[%c0_24, %c0_25] : memref<32x1024xf32, #tpu.memory_space<vmem>>, vector<32x1024xf32>
    %cst_26 = arith.constant dense<0.000000e+00> : vector<8x1024xf32>
    %41 = tpu.matmul %38, %40, %cst_26 {dimension_numbers = #tpu.dot_dimension_numbers<[1], [0], [0], [1], [0, 0, 1, 1], [], []>} : vector<8x32xf32>, vector<32x1024xf32>, vector<8x1024xf32> -> vector<8x1024xf32>
    %c0_27 = arith.constant 0 : index
    %c0_28 = arith.constant 0 : index
    %42 = vector.load %arg9[%c0_27, %c0_28] : memref<32x128xf32, #tpu.memory_space<vmem>>, vector<32x128xf32>
    %cst_29 = arith.constant dense<0.000000e+00> : vector<8x128xf32>
    %43 = tpu.matmul %39, %42, %cst_29 {dimension_numbers = #tpu.dot_dimension_numbers<[1], [0], [0], [1], [0, 0, 1, 1], [], []>} : vector<8x32xf32>, vector<32x128xf32>, vector<8x128xf32> -> vector<8x128xf32>
    %44 = tpu.concatenate %43, %43 in 1 : vector<8x128xf32>, vector<8x128xf32> -> vector<8x256xf32>
    %45 = tpu.concatenate %44, %44 in 1 : vector<8x256xf32>, vector<8x256xf32> -> vector<8x512xf32>
    %46 = tpu.concatenate %45, %45 in 1 : vector<8x512xf32>, vector<8x512xf32> -> vector<8x1024xf32>
    %47 = arith.mulf %41, %46 : vector<8x1024xf32>
    %c0_30 = arith.constant 0 : index
    %c0_31 = arith.constant 0 : index
    %48 = vector.load %arg10[%c0_30, %c0_31] : memref<1024x256xf32, #tpu.memory_space<vmem>>, vector<1024x256xf32>
    %cst_32 = arith.constant dense<0.000000e+00> : vector<8x256xf32>
    %49 = tpu.matmul %47, %48, %cst_32 {dimension_numbers = #tpu.dot_dimension_numbers<[1], [0], [0], [1], [0, 0, 1, 1], [], []>} : vector<8x1024xf32>, vector<1024x256xf32>, vector<8x256xf32> -> vector<8x256xf32>
    %c0_33 = arith.constant 0 : index
    %c0_34 = arith.constant 0 : index
    %50 = vector.load %arg11[%c0_33, %c0_34] : memref<64x256xf32, #tpu.memory_space<vmem>>, vector<64x256xf32>
    %cst_35 = arith.constant dense<0.000000e+00> : vector<8x256xf32>
    %51 = tpu.matmul %37, %50, %cst_35 {dimension_numbers = #tpu.dot_dimension_numbers<[1], [0], [0], [1], [0, 0, 1, 1], [], []>} : vector<8x64xf32>, vector<64x256xf32>, vector<8x256xf32> -> vector<8x256xf32>
    %52 = arith.addf %49, %51 : vector<8x256xf32>
    %c0_36 = arith.constant 0 : index
    %c0_37 = arith.constant 0 : index
    %53 = vector.load %arg12[%c0_36, %c0_37] : memref<1x256xf32, #tpu.memory_space<vmem>>, vector<1x256xf32>
    %54 = vector.broadcast %53 : vector<1x256xf32> to vector<8x256xf32>
    %55 = arith.addf %52, %54 : vector<8x256xf32>
    %cst_38 = arith.constant 0.000000e+00 : f32
    %56 = vector.broadcast %cst_38 : f32 to vector<8x256xf32>
    %57 = arith.maximumf %55, %56 : vector<8x256xf32>
    %c0_39 = arith.constant 0 : index
    %c0_40 = arith.constant 0 : index
    %58 = vector.load %arg13[%c0_39, %c0_40] : memref<256x128xf32, #tpu.memory_space<vmem>>, vector<256x128xf32>
    %cst_41 = arith.constant dense<0.000000e+00> : vector<8x128xf32>
    %59 = tpu.matmul %57, %58, %cst_41 {dimension_numbers = #tpu.dot_dimension_numbers<[1], [0], [0], [1], [0, 0, 1, 1], [], []>} : vector<8x256xf32>, vector<256x128xf32>, vector<8x128xf32> -> vector<8x128xf32>
    %c0_42 = arith.constant 0 : index
    %c0_43 = arith.constant 0 : index
    %60 = vector.load %arg14[%c0_42, %c0_43] : memref<64x128xf32, #tpu.memory_space<vmem>>, vector<64x128xf32>
    %cst_44 = arith.constant dense<0.000000e+00> : vector<8x128xf32>
    %61 = tpu.matmul %0, %60, %cst_44 {dimension_numbers = #tpu.dot_dimension_numbers<[1], [0], [0], [1], [0, 0, 1, 1], [], []>} : vector<8x64xf32>, vector<64x128xf32>, vector<8x128xf32> -> vector<8x128xf32>
    %62 = arith.addf %59, %61 : vector<8x128xf32>
    %c0_45 = arith.constant 0 : index
    %c0_46 = arith.constant 0 : index
    %63 = vector.load %arg15[%c0_45, %c0_46] : memref<1x128xf32, #tpu.memory_space<vmem>>, vector<1x128xf32>
    %64 = vector.broadcast %63 : vector<1x128xf32> to vector<8x128xf32>
    %65 = arith.addf %62, %64 : vector<8x128xf32>
    %cst_47 = arith.constant 0.000000e+00 : f32
    %66 = vector.broadcast %cst_47 : f32 to vector<8x128xf32>
    %67 = arith.maximumf %65, %66 : vector<8x128xf32>
    %c0_48 = arith.constant 0 : index
    %c0_49 = arith.constant 0 : index
    %68 = vector.load %arg16[%c0_48, %c0_49] : memref<8x128xf32, #tpu.memory_space<vmem>>, vector<8x128xf32>
    tpu.vector_store %arg16[%c0_48, %c0_49], %67 {strides = array<i32>} : memref<8x128xf32, #tpu.memory_space<vmem>>, vector<8x128xf32>,
    return
  }
  func.func @transform_0(%arg0: i32) -> (i32, i32) {
    %c0_i32 = arith.constant 0 : i32
    %c0_i32_0 = arith.constant 0 : i32
    return %arg0, %c0_i32 : i32, i32
  }
  func.func @transform_1(%arg0: i32) -> (i32, i32) {
    %c0_i32 = arith.constant 0 : i32
    %c0_i32_0 = arith.constant 0 : i32
    %c0_i32_1 = arith.constant 0 : i32
    return %c0_i32, %c0_i32_0 : i32, i32
  }
  func.func @transform_2(%arg0: i32) -> (i32, i32) {
    %c0_i32 = arith.constant 0 : i32
    %c0_i32_0 = arith.constant 0 : i32
    %c0_i32_1 = arith.constant 0 : i32
    return %c0_i32, %c0_i32_0 : i32, i32
  }
  func.func @transform_3(%arg0: i32) -> (i32, i32) {
    %c0_i32 = arith.constant 0 : i32
    %c0_i32_0 = arith.constant 0 : i32
    %c0_i32_1 = arith.constant 0 : i32
    return %c0_i32, %c0_i32_0 : i32, i32
  }
  func.func @transform_4(%arg0: i32) -> (i32, i32) {
    %c0_i32 = arith.constant 0 : i32
    %c0_i32_0 = arith.constant 0 : i32
    %c0_i32_1 = arith.constant 0 : i32
    return %c0_i32, %c0_i32_0 : i32, i32
  }
  func.func @transform_5(%arg0: i32) -> (i32, i32) {
    %c0_i32 = arith.constant 0 : i32
    %c0_i32_0 = arith.constant 0 : i32
    %c0_i32_1 = arith.constant 0 : i32
    return %c0_i32, %c0_i32_0 : i32, i32
  }
  func.func @transform_6(%arg0: i32) -> (i32, i32) {
    %c0_i32 = arith.constant 0 : i32
    %c0_i32_0 = arith.constant 0 : i32
    %c0_i32_1 = arith.constant 0 : i32
    return %c0_i32, %c0_i32_0 : i32, i32
  }
  func.func @transform_7(%arg0: i32) -> (i32, i32) {
    %c0_i32 = arith.constant 0 : i32
    %c0_i32_0 = arith.constant 0 : i32
    %c0_i32_1 = arith.constant 0 : i32
    return %c0_i32, %c0_i32_0 : i32, i32
  }
  func.func @transform_8(%arg0: i32) -> (i32, i32) {
    %c0_i32 = arith.constant 0 : i32
    %c0_i32_0 = arith.constant 0 : i32
    %c0_i32_1 = arith.constant 0 : i32
    return %c0_i32, %c0_i32_0 : i32, i32
  }
  func.func @transform_9(%arg0: i32) -> (i32, i32) {
    %c0_i32 = arith.constant 0 : i32
    %c0_i32_0 = arith.constant 0 : i32
    %c0_i32_1 = arith.constant 0 : i32
    return %c0_i32, %c0_i32_0 : i32, i32
  }
  func.func @transform_10(%arg0: i32) -> (i32, i32) {
    %c0_i32 = arith.constant 0 : i32
    %c0_i32_0 = arith.constant 0 : i32
    %c0_i32_1 = arith.constant 0 : i32
    return %c0_i32, %c0_i32_0 : i32, i32
  }
  func.func @transform_11(%arg0: i32) -> (i32, i32) {
    %c0_i32 = arith.constant 0 : i32
    %c0_i32_0 = arith.constant 0 : i32
    %c0_i32_1 = arith.constant 0 : i32
    return %c0_i32, %c0_i32_0 : i32, i32
  }
  func.func @transform_12(%arg0: i32) -> (i32, i32) {
    %c0_i32 = arith.constant 0 : i32
    %c0_i32_0 = arith.constant 0 : i32
    %c0_i32_1 = arith.constant 0 : i32
    return %c0_i32, %c0_i32_0 : i32, i32
  }
  func.func @transform_13(%arg0: i32) -> (i32, i32) {
    %c0_i32 = arith.constant 0 : i32
    %c0_i32_0 = arith.constant 0 : i32
    %c0_i32_1 = arith.constant 0 : i32
    return %c0_i32, %c0_i32_0 : i32, i32
  }
  func.func @transform_14(%arg0: i32) -> (i32, i32) {
    %c0_i32 = arith.constant 0 : i32
    %c0_i32_0 = arith.constant 0 : i32
    %c0_i32_1 = arith.constant 0 : i32
    return %c0_i32, %c0_i32_0 : i32, i32
  }
  func.func @transform_15(%arg0: i32) -> (i32, i32) {
    %c0_i32 = arith.constant 0 : i32
    %c0_i32_0 = arith.constant 0 : i32
    return %arg0, %c0_i32 : i32, i32
  }
}

</mosaic_0001>

<llo_original>
// kernel: tile.14
$region0: #{tile.14}
  %s0 = inlined_call_operand.vmem [shape: f32[32,4,32], index: 0, kind: input, shape index: {}]
  %s1 = inlined_call_operand.vmem [shape: f32[32,128], index: 1, kind: output, shape index: {}]
  $region1: #{tile.14} parent=0
    #allocation0 [shape = 'u8[131072]{0}', space=vmem, size = 0x20000, scoped, tag = 'scoped mem for input reshape']
    %s3 = sshllo.u32 0, 4
    %s4 = smul.addr 4, 31
    %s5 = scalar_lea.vmem %s0, %s4
    %v6 = vld [vmem:[%s5] sm:%s3]
    %s7 = scalar_lea.vmem [#allocation0], 248
    %8 = vst [vmem:[%s7] sm:%s3] %v6
    %s9 = smul.addr 4, 30
    %s10 = scalar_lea.vmem %s0, %s9
    %v11 = vld [vmem:[%s10] sm:%s3]
    %s12 = scalar_lea.vmem [#allocation0], 240
    %13 = vst [vmem:[%s12] sm:%s3] %v11
    %s14 = smul.addr 4, 29
    %s15 = scalar_lea.vmem %s0, %s14
    %v16 = vld [vmem:[%s15] sm:%s3]
    %s17 = scalar_lea.vmem [#allocation0], 232
    %18 = vst [vmem:[%s17] sm:%s3] %v16
    %s19 = smul.addr 4, 28
    %s20 = scalar_lea.vmem %s0, %s19
    %v21 = vld [vmem:[%s20] sm:%s3]
    %s22 = scalar_lea.vmem [#allocation0], 224
    %23 = vst [vmem:[%s22] sm:%s3] %v21
    %s24 = smul.addr 4, 27
    %s25 = scalar_lea.vmem %s0, %s24
    %v26 = vld [vmem:[%s25] sm:%s3]
    %s27 = scalar_lea.vmem [#allocation0], 216
    %28 = vst [vmem:[%s27] sm:%s3] %v26
    %s29 = smul.addr 4, 26
    %s30 = scalar_lea.vmem %s0, %s29
    %v31 = vld [vmem:[%s30] sm:%s3]
    %s32 = scalar_lea.vmem [#allocation0], 208
    %33 = vst [vmem:[%s32] sm:%s3] %v31
    %s34 = smul.addr 4, 25
    %s35 = scalar_lea.vmem %s0, %s34
    %v36 = vld [vmem:[%s35] sm:%s3]
    %s37 = scalar_lea.vmem [#allocation0], 200
    %38 = vst [vmem:[%s37] sm:%s3] %v36
    %s39 = smul.addr 4, 24
    %s40 = scalar_lea.vmem %s0, %s39
    %v41 = vld [vmem:[%s40] sm:%s3]
    %s42 = scalar_lea.vmem [#allocation0], 192
    %43 = vst [vmem:[%s42] sm:%s3] %v41
    %s44 = smul.addr 4, 23
    %s45 = scalar_lea.vmem %s0, %s44
    %v46 = vld [vmem:[%s45] sm:%s3]
    %s47 = scalar_lea.vmem [#allocation0], 184
    %48 = vst [vmem:[%s47] sm:%s3] %v46
    %s49 = smul.addr 4, 22
    %s50 = scalar_lea.vmem %s0, %s49
    %v51 = vld [vmem:[%s50] sm:%s3]
    %s52 = scalar_lea.vmem [#allocation0], 176
    %53 = vst [vmem:[%s52] sm:%s3] %v51
    %s54 = smul.addr 4, 21
    %s55 = scalar_lea.vmem %s0, %s54
    %v56 = vld [vmem:[%s55] sm:%s3]
    %s57 = scalar_lea.vmem [#allocation0], 168
    %58 = vst [vmem:[%s57] sm:%s3] %v56
    %s59 = smul.addr 4, 20
    %s60 = scalar_lea.vmem %s0, %s59
    %v61 = vld [vmem:[%s60] sm:%s3]
    %s62 = scalar_lea.vmem [#allocation0], 160
    %63 = vst [vmem:[%s62] sm:%s3] %v61
    %s64 = smul.addr 4, 19
    %s65 = scalar_lea.vmem %s0, %s64
    %v66 = vld [vmem:[%s65] sm:%s3]
    %s67 = scalar_lea.vmem [#allocation0], 152
    %68 = vst [vmem:[%s67] sm:%s3] %v66
    %s69 = smul.addr 4, 18
    %s70 = scalar_lea.vmem %s0, %s69
    %v71 = vld [vmem:[%s70] sm:%s3]
    %s72 = scalar_lea.vmem [#allocation0], 144
    %73 = vst [vmem:[%s72] sm:%s3] %v71
    %s74 = smul.addr 4, 17
    %s75 = scalar_lea.vmem %s0, %s74
    %v76 = vld [vmem:[%s75] sm:%s3]
    %s77 = scalar_lea.vmem [#allocation0], 136
    %78 = vst [vmem:[%s77] sm:%s3] %v76
    %s79 = smul.addr 4, 16
    %s80 = scalar_lea.vmem %s0, %s79
    %v81 = vld [vmem:[%s80] sm:%s3]
    %s82 = scalar_lea.vmem [#allocation0], 128
    %83 = vst [vmem:[%s82] sm:%s3] %v81
    %s84 = smul.addr 4, 15
    %s85 = scalar_lea.vmem %s0, %s84
    %v86 = vld [vmem:[%s85] sm:%s3]
    %s87 = scalar_lea.vmem [#allocation0], 120
    %88 = vst [vmem:[%s87] sm:%s3] %v86
    %s89 = smul.addr 4, 14
    %s90 = scalar_lea.vmem %s0, %s89
    %v91 = vld [vmem:[%s90] sm:%s3]
    %s92 = scalar_lea.vmem [#allocation0], 112
    %93 = vst [vmem:[%s92] sm:%s3] %v91
    %s94 = smul.addr 4, 13
    %s95 = scalar_lea.vmem %s0, %s94
    %v96 = vld [vmem:[%s95] sm:%s3]
    %s97 = scalar_lea.vmem [#allocation0], 104
    %98 = vst [vmem:[%s97] sm:%s3] %v96
    %s99 = smul.addr 4, 12
    %s100 = scalar_lea.vmem %s0, %s99
    %v101 = vld [vmem:[%s100] sm:%s3]
    %s102 = scalar_lea.vmem [#allocation0], 96
    %103 = vst [vmem:[%s102] sm:%s3] %v101
    %s104 = smul.addr 4, 11
    %s105 = scalar_lea.vmem %s0, %s104
    %v106 = vld [vmem:[%s105] sm:%s3]
    %s107 = scalar_lea.vmem [#allocation0], 88
    %108 = vst [vmem:[%s107] sm:%s3] %v106
    %s109 = smul.addr 4, 10
    %s110 = scalar_lea.vmem %s0, %s109
    %v111 = vld [vmem:[%s110] sm:%s3]
    %s112 = scalar_lea.vmem [#allocation0], 80
    %113 = vst [vmem:[%s112] sm:%s3] %v111
    %s114 = smul.addr 4, 9
    %s115 = scalar_lea.vmem %s0, %s114
    %v116 = vld [vmem:[%s115] sm:%s3]
    %s117 = scalar_lea.vmem [#allocation0], 72
    %118 = vst [vmem:[%s117] sm:%s3] %v116
    %s119 = smul.addr 4, 8
    %s120 = scalar_lea.vmem %s0, %s119
    %v121 = vld [vmem:[%s120] sm:%s3]
    %s122 = scalar_lea.vmem [#allocation0], 64
    %123 = vst [vmem:[%s122] sm:%s3] %v121
    %s124 = smul.addr 4, 7
    %s125 = scalar_lea.vmem %s0, %s124
    %v126 = vld [vmem:[%s125] sm:%s3]
    %s127 = scalar_lea.vmem [#allocation0], 56
    %128 = vst [vmem:[%s127] sm:%s3] %v126
    %s129 = smul.addr 4, 6
    %s130 = scalar_lea.vmem %s0, %s129
    %v131 = vld [vmem:[%s130] sm:%s3]
    %s132 = scalar_lea.vmem [#allocation0], 48
    %133 = vst [vmem:[%s132] sm:%s3] %v131
    %s134 = smul.addr 4, 5
    %s135 = scalar_lea.vmem %s0, %s134
    %v136 = vld [vmem:[%s135] sm:%s3]
    %s137 = scalar_lea.vmem [#allocation0], 40
    %138 = vst [vmem:[%s137] sm:%s3] %v136
    %s139 = smul.addr 4, 4
    %s140 = scalar_lea.vmem %s0, %s139
    %v141 = vld [vmem:[%s140] sm:%s3]
    %s142 = scalar_lea.vmem [#allocation0], 32
    %143 = vst [vmem:[%s142] sm:%s3] %v141
    %s144 = smul.addr 4, 3
    %s145 = scalar_lea.vmem %s0, %s144
    %v146 = vld [vmem:[%s145] sm:%s3]
    %s147 = scalar_lea.vmem [#allocation0], 24
    %148 = vst [vmem:[%s147] sm:%s3] %v146
    %s149 = smul.addr 4, 2
    %s150 = scalar_lea.vmem %s0, %s149
    %v151 = vld [vmem:[%s150] sm:%s3]
    %s152 = scalar_lea.vmem [#allocation0], 16
    %153 = vst [vmem:[%s152] sm:%s3] %v151
    %s154 = scalar_lea.vmem %s0, 4
    %v155 = vld [vmem:[%s154] sm:%s3]
    %s156 = scalar_lea.vmem [#allocation0], 8
    %157 = vst [vmem:[%s156] sm:%s3] %v155
    %v158 = vld [vmem:[%s0] sm:%s3]
    %159 = vst [vmem:[#allocation0] sm:%s3] %v158
    %v160 = vld [vmem:[#allocation0] ss:$8 sm:$0xf]
    %v161 = vld [vmem:[#allocation0] ss:$8 sm:$0xf0]
    %vm162 = vcmask 1047556
    %v163 = vsel %vm162, %v161, %v160
    %vm164 = vcmask 261120
    %165 = vst.msk [vmem:[%s1] sm:$0xff] %vm164, %v163
    %s166 = scalar_lea.vmem [#allocation0], 64
    %v167 = vld [vmem:[%s166] ss:$8 sm:$0xf]
    %s168 = scalar_lea.vmem [#allocation0], 64
    %v169 = vld [vmem:[%s168] ss:$8 sm:$0xf0]
    %vm170 = vcmask 1047556
    %v171 = vsel %vm170, %v169, %v167
    %vm172 = vcmask 261120
    %s173 = scalar_lea.vmem %s1, 8
    %174 = vst.msk [vmem:[%s173] sm:$0xff] %vm172, %v171
    %s175 = scalar_lea.vmem [#allocation0], 128
    %v176 = vld [vmem:[%s175] ss:$8 sm:$0xf]
    %s177 = scalar_lea.vmem [#allocation0], 128
    %v178 = vld [vmem:[%s177] ss:$8 sm:$0xf0]
    %vm179 = vcmask 1047556
    %v180 = vsel %vm179, %v178, %v176
    %vm181 = vcmask 261120
    %s182 = scalar_lea.vmem %s1, 16
    %183 = vst.msk [vmem:[%s182] sm:$0xff] %vm181, %v180
    %s184 = scalar_lea.vmem [#allocation0], 192
    %v185 = vld [vmem:[%s184] ss:$8 sm:$0xf]
    %s186 = scalar_lea.vmem [#allocation0], 192
    %v187 = vld [vmem:[%s186] ss:$8 sm:$0xf0]
    %vm188 = vcmask 1047556
    %v189 = vsel %vm188, %v187, %v185
    %vm190 = vcmask 261120
    %s191 = scalar_lea.vmem %s1, 24
    %192 = vst.msk [vmem:[%s191] sm:$0xff] %vm190, %v189
    %s193 = scalar_lea.vmem [#allocation0], 3
    %v194 = vld [vmem:[%s193] ss:$8 sm:$0xf]
    %s195 = scalar_lea.vmem [#allocation0], 3
    %v196 = vld [vmem:[%s195] ss:$8 sm:$0xf0]
    %vm197 = vcmask 1047556
    %v198 = vsel %vm197, %v196, %v194
    %199 = vrot.lane.b32.xlu0 %v198, 96
    %v200 = vpop.permute.xlu0 %199
    %vm201 = vcmask 1048320
    %202 = vst.msk [vmem:[%s1] sm:$0xff] %vm201, %v200
    %s203 = scalar_lea.vmem [#allocation0], 67
    %v204 = vld [vmem:[%s203] ss:$8 sm:$0xf]
    %s205 = scalar_lea.vmem [#allocation0], 67
    %v206 = vld [vmem:[%s205] ss:$8 sm:$0xf0]
    %vm207 = vcmask 1047556
    %v208 = vsel %vm207, %v206, %v204
    %209 = vrot.lane.b32.xlu0 %v208, 96
    %v210 = vpop.permute.xlu0 %209
    %vm211 = vcmask 1048320
    %s212 = scalar_lea.vmem %s1, 8
    %213 = vst.msk [vmem:[%s212] sm:$0xff] %vm211, %v210
    %s214 = scalar_lea.vmem [#allocation0], 131
    %v215 = vld [vmem:[%s214] ss:$8 sm:$0xf]
    %s216 = scalar_lea.vmem [#allocation0], 131
    %v217 = vld [vmem:[%s216] ss:$8 sm:$0xf0]
    %vm218 = vcmask 1047556
    %v219 = vsel %vm218, %v217, %v215
    %220 = vrot.lane.b32.xlu0 %v219, 96
    %v221 = vpop.permute.xlu0 %220
    %vm222 = vcmask 1048320
    %s223 = scalar_lea.vmem %s1, 16
    %224 = vst.msk [vmem:[%s223] sm:$0xff] %vm222, %v221
    %s225 = scalar_lea.vmem [#allocation0], 195
    %v226 = vld [vmem:[%s225] ss:$8 sm:$0xf]
    %s227 = scalar_lea.vmem [#allocation0], 195
    %v228 = vld [vmem:[%s227] ss:$8 sm:$0xf0]
    %vm229 = vcmask 1047556
    %v230 = vsel %vm229, %v228, %v226
    %231 = vrot.lane.b32.xlu0 %v230, 96
    %v232 = vpop.permute.xlu0 %231
    %vm233 = vcmask 1048320
    %s234 = scalar_lea.vmem %s1, 24
    %235 = vst.msk [vmem:[%s234] sm:$0xff] %vm233, %v232
    %s236 = scalar_lea.vmem [#allocation0], 2
    %v237 = vld [vmem:[%s236] ss:$8 sm:$0xf]
    %s238 = scalar_lea.vmem [#allocation0], 2
    %v239 = vld [vmem:[%s238] ss:$8 sm:$0xf0]
    %vm240 = vcmask 1047556
    %v241 = vsel %vm240, %v239, %v237
    %242 = vrot.lane.b32.xlu0 %v241, 64
    %v243 = vpop.permute.xlu0 %242
    %vm244 = vcmask 785920
    %245 = vst.msk [vmem:[%s1] sm:$0xff] %vm244, %v243
    %s246 = scalar_lea.vmem [#allocation0], 66
    %v247 = vld [vmem:[%s246] ss:$8 sm:$0xf]
    %s248 = scalar_lea.vmem [#allocation0], 66
    %v249 = vld [vmem:[%s248] ss:$8 sm:$0xf0]
    %vm250 = vcmask 1047556
    %v251 = vsel %vm250, %v249, %v247
    %252 = vrot.lane.b32.xlu0 %v251, 64
    %v253 = vpop.permute.xlu0 %252
    %vm254 = vcmask 785920
    %s255 = scalar_lea.vmem %s1, 8
    %256 = vst.msk [vmem:[%s255] sm:$0xff] %vm254, %v253
    %s257 = scalar_lea.vmem [#allocation0], 130
    %v258 = vld [vmem:[%s257] ss:$8 sm:$0xf]
    %s259 = scalar_lea.vmem [#allocation0], 130
    %v260 = vld [vmem:[%s259] ss:$8 sm:$0xf0]
    %vm261 = vcmask 1047556
    %v262 = vsel %vm261, %v260, %v258
    %263 = vrot.lane.b32.xlu0 %v262, 64
    %v264 = vpop.permute.xlu0 %263
    %vm265 = vcmask 785920
    %s266 = scalar_lea.vmem %s1, 16
    %267 = vst.msk [vmem:[%s266] sm:$0xff] %vm265, %v264
    %s268 = scalar_lea.vmem [#allocation0], 194
    %v269 = vld [vmem:[%s268] ss:$8 sm:$0xf]
    %s270 = scalar_lea.vmem [#allocation0], 194
    %v271 = vld [vmem:[%s270] ss:$8 sm:$0xf0]
    %vm272 = vcmask 1047556
    %v273 = vsel %vm272, %v271, %v269
    %274 = vrot.lane.b32.xlu0 %v273, 64
    %v275 = vpop.permute.xlu0 %274
    %vm276 = vcmask 785920
    %s277 = scalar_lea.vmem %s1, 24
    %278 = vst.msk [vmem:[%s277] sm:$0xff] %vm276, %v275
    %s279 = scalar_lea.vmem [#allocation0], 1
    %v280 = vld [vmem:[%s279] ss:$8 sm:$0xf]
    %s281 = scalar_lea.vmem [#allocation0], 1
    %v282 = vld [vmem:[%s281] ss:$8 sm:$0xf0]
    %vm283 = vcmask 1047556
    %v284 = vsel %vm283, %v282, %v280
    %285 = vrot.lane.b32.xlu0 %v284, 32
    %v286 = vpop.permute.xlu0 %285
    %vm287 = vcmask 523520
    %288 = vst.msk [vmem:[%s1] sm:$0xff] %vm287, %v286
    %s289 = scalar_lea.vmem [#allocation0], 65
    %v290 = vld [vmem:[%s289] ss:$8 sm:$0xf]
    %s291 = scalar_lea.vmem [#allocation0], 65
    %v292 = vld [vmem:[%s291] ss:$8 sm:$0xf0]
    %vm293 = vcmask 1047556
    %v294 = vsel %vm293, %v292, %v290
    %295 = vrot.lane.b32.xlu0 %v294, 32
    %v296 = vpop.permute.xlu0 %295
    %vm297 = vcmask 523520
    %s298 = scalar_lea.vmem %s1, 8
    %299 = vst.msk [vmem:[%s298] sm:$0xff] %vm297, %v296
    %s300 = scalar_lea.vmem [#allocation0], 129
    %v301 = vld [vmem:[%s300] ss:$8 sm:$0xf]
    %s302 = scalar_lea.vmem [#allocation0], 129
    %v303 = vld [vmem:[%s302] ss:$8 sm:$0xf0]
    %vm304 = vcmask 1047556
    %v305 = vsel %vm304, %v303, %v301
    %306 = vrot.lane.b32.xlu0 %v305, 32
    %v307 = vpop.permute.xlu0 %306
    %vm308 = vcmask 523520
    %s309 = scalar_lea.vmem %s1, 16
    %310 = vst.msk [vmem:[%s309] sm:$0xff] %vm308, %v307
    %s311 = scalar_lea.vmem [#allocation0], 193
    %v312 = vld [vmem:[%s311] ss:$8 sm:$0xf]
    %s313 = scalar_lea.vmem [#allocation0], 193
    %v314 = vld [vmem:[%s313] ss:$8 sm:$0xf0]
    %vm315 = vcmask 1047556
    %v316 = vsel %vm315, %v314, %v312
    %317 = vrot.lane.b32.xlu0 %v316, 32
    %v318 = vpop.permute.xlu0 %317
    %vm319 = vcmask 523520
    %s320 = scalar_lea.vmem %s1, 24
    %321 = vst.msk [vmem:[%s320] sm:$0xff] %vm319, %v318

</llo_original>
